<compile_context>
chip_gen: v7x
topology: tpu7x:2x2x1
jax: 0.10.0
libtpu: 0.0.40
codegen_flags: <defaults>
</compile_context>

<pallas_src>
import functools

import numpy as np

import jax
import jax.numpy as jnp
from jax.experimental import pallas as pl
from jax.experimental.pallas import tpu as pltpu


def _focal_tile_kernel(x_ref, t_ref, out_ref, *, gamma, alpha, num_classes,
                       rows_per_block, total_valid, needs_mask):
    """One (batch, row-block) tile covering rows_per_block * 128 positions.

    x_ref:   (1, C, TS, 128) logits
    t_ref:   (1, TS, 128)    int32 targets
    out_ref: (1, 1, 1, 1)    per-(batch, block) partial loss sum
    """
    t = t_ref[0]                                          # (TS, 128)

    # Running max over classes: dense (TS, 128) VPU maxes, no XLU reductions.
    m = x_ref[0, 0].astype(jnp.float32)
    for k in range(1, num_classes):
        m = jnp.maximum(m, x_ref[0, k].astype(jnp.float32))

    # Sum-of-exp and the target/alpha gathers, per class, on dense slices.
    sum_exp = jnp.zeros_like(m)
    z_t = jnp.zeros_like(m)
    a_t = jnp.zeros_like(m) if alpha is not None else None
    for k in range(num_classes):
        z_k = x_ref[0, k].astype(jnp.float32) - m
        sum_exp = sum_exp + jnp.exp(z_k)
        hit = t == k                                      # scalar class compare
        z_t = jnp.where(hit, z_k, z_t)
        if alpha is not None:
            a_t = jnp.where(hit, jnp.float32(alpha[k]), a_t)

    logpt = z_t - jnp.log(sum_exp)                        # log p_target, (TS, 128)
    pt = jnp.exp(logpt)
    if alpha is not None:
        logpt = logpt * a_t

    g = float(gamma)
    if g == 0.0:
        loss = -logpt
    elif g.is_integer() and 0 < g <= 8:
        # Integer gamma: repeated VPU multiplies instead of EUP pow.
        omp = 1.0 - pt
        w = omp
        for _ in range(int(g) - 1):
            w = w * omp
        loss = -(w * logpt)
    else:
        loss = -((1.0 - pt) ** g) * logpt

    def _reduce_and_store(vals):
        # Single per-tile tree reduction to one (1, 1) value; tiny store.
        part = jnp.sum(vals, axis=-1, keepdims=True)      # (TS, 1)  cross-lane
        part = jnp.sum(part, axis=-2, keepdims=True)      # (1, 1)   cross-sublane
        out_ref[...] = part.reshape(1, 1, 1, 1)

    if needs_mask:
        j = pl.program_id(1)
        last = pl.num_programs(1) - 1

        @pl.when(j < last)
        def _():
            # Interior blocks: fully valid, no mask work on the hot path.
            _reduce_and_store(loss)

        @pl.when(j == last)
        def _():
            # Cold last block: mask padded / out-of-extent positions BEFORE the
            # reduction so garbage (NaN/Inf) never reaches the partial sum.
            ts, ln = loss.shape
            row = jax.lax.broadcasted_iota(jnp.int32, (ts, ln), 0)
            lane = jax.lax.broadcasted_iota(jnp.int32, (ts, ln), 1)
            pos = (j * rows_per_block + row) * ln + lane
            _reduce_and_store(jnp.where(pos < total_valid, loss, 0.0))
    else:
        _reduce_and_store(loss)


def focal_loss(x, target, gamma=0.0, alpha=None, size_average=True,
               max_rows_per_block=None):
    """Pallas TPU implementation of FocalLoss.forward(input, target)."""
    lanes = 128

    # ---- canonical (B, C, L) view; positions stay in native NCHW order -------
    if x.ndim > 2:
        b, c = int(x.shape[0]), int(x.shape[1])
        x3 = x.reshape(b, c, -1)                          # free view of NCHW
        t3 = target.reshape(b, -1).astype(jnp.int32)
    else:
        # TODO(synk): add a classes-on-lanes path for flat (M, C) inputs with
        # C >= 128 that avoids this wrapper transpose (an extra HBM pass).
        m_rows, c = int(x.shape[0]), int(x.shape[1])
        b = 1
        x3 = jnp.transpose(x).reshape(1, c, m_rows)
        t3 = target.reshape(1, -1).astype(jnp.int32)
    l = int(x3.shape[2])
    total_positions = b * l

    # ---- alpha handling (mirrors FocalLoss.__init__), baked as constants -----
    if alpha is None:
        alpha_list = None
    elif isinstance(alpha, (float, int)) and not isinstance(alpha, bool):
        alpha_list = (float(alpha), 1.0 - float(alpha))
    elif isinstance(alpha, (list, tuple)):
        alpha_list = tuple(float(a) for a in alpha)
    else:
        alpha_list = tuple(float(a) for a in
                           np.asarray(jax.device_get(alpha)).reshape(-1))
    if alpha_list is not None:
        # PyTorch's alpha.gather(0, target) needs a weight for every class.
        assert len(alpha_list) >= c, "alpha must supply a weight for every class"
        alpha_list = alpha_list[:c]

    # ---- pad positions once to a multiple of 128, go sublane+lane dense ------
    l_pad = ((l + lanes - 1) // lanes) * lanes
    if l_pad != l:
        x3 = jnp.pad(x3, ((0, 0), (0, 0), (0, l_pad - l)))
        t3 = jnp.pad(t3, ((0, 0), (0, l_pad - l)))        # pad targets with class 0
    s = l_pad // lanes                                    # 128-position sublane rows
    x4 = x3.reshape(b, c, s, lanes)
    t4 = t3.reshape(b, s, lanes)

    # ---- row-tile size against a per-generation VMEM budget ------------------
    try:
        vmem_capacity = int(pltpu.get_tpu_info().vmem_capacity_bytes)
    except Exception:  # conservative (v7x-sized) fallback
        vmem_capacity = 64 * 1024 * 1024
    vmem_limit = min(vmem_capacity // 2, 64 * 1024 * 1024)
    tile_budget = max(8 * 1024 * 1024, vmem_limit - 12 * 1024 * 1024)

    itemsize = jnp.dtype(x4.dtype).itemsize
    # Per 128-position row: double-buffered logits + targets blocks plus ~10
    # live f32 (TS, 128) intermediates inside the kernel body.
    per_row_bytes = lanes * (2 * c * itemsize + 2 * 4 + 10 * 4)
    cap_rows = max(8, (tile_budget // per_row_bytes) // 8 * 8)
    if max_rows_per_block is not None:
        cap_rows = min(cap_rows, max(8, (int(max_rows_per_block) // 8) * 8))
    # TODO(synk): very large C can still exceed VMEM at the minimum 8-row tile;
    # that would need a class-axis-tiled (online-softmax) variant.
    ts = s if s <= cap_rows else cap_rows                 # full dim or multiple of 8
    n_row_blocks = int(pl.cdiv(s, ts))
    needs_mask = (l_pad != l) or (s % ts != 0)

    kernel = functools.partial(
        _focal_tile_kernel, gamma=float(gamma), alpha=alpha_list,
        num_classes=c, rows_per_block=ts, total_valid=l, needs_mask=needs_mask)

    partials = pl.pallas_call(
        kernel,
        out_shape=jax.ShapeDtypeStruct((b, n_row_blocks, 1, 1), jnp.float32),
        grid_spec=pltpu.PrefetchScalarGridSpec(
            num_scalar_prefetch=0,
            grid=(b, n_row_blocks),
            in_specs=[
                pl.BlockSpec((1, c, ts, lanes), lambda i, j: (i, 0, j, 0)),
                pl.BlockSpec((1, ts, lanes), lambda i, j: (i, j, 0)),
            ],
            out_specs=pl.BlockSpec((1, 1, 1, 1), lambda i, j: (i, j, 0, 0)),
        ),
        compiler_params=pltpu.CompilerParams(
            dimension_semantics=("parallel", "parallel"),
            vmem_limit_bytes=vmem_limit),
    )(x4, t4)

    total = jnp.sum(partials)
    if size_average:
        total = total / jnp.float32(total_positions)
    return total


def _focal_loss_ref(x, target, gamma, alpha_arr, size_average):
    """Pure-JAX reference mirroring the PyTorch forward exactly."""
    if x.ndim > 2:
        n, c = x.shape[0], x.shape[1]
        x = jnp.transpose(x.reshape(n, c, -1), (0, 2, 1)).reshape(-1, c)
    t = target.reshape(-1).astype(jnp.int32)
    logp = jax.nn.log_softmax(x.astype(jnp.float32), axis=1)
    logpt = jnp.take_along_axis(logp, t[:, None], axis=1)[:, 0]
    pt = jnp.exp(logpt)
    if alpha_arr is not None:
        logpt = logpt * alpha_arr[t]
    loss = -1.0 * (1.0 - pt) ** gamma * logpt
    return jnp.mean(loss) if size_average else jnp.sum(loss)


if __name__ == "__main__":
    key = jax.random.PRNGKey(0)
    k1, k2, k3, k4, k5, k6 = jax.random.split(key, 6)

    # Test 1: NCHW logits (L = 256, multiple of 128), list alpha, gamma=2, mean.
    N, C, H, W = 2, 4, 16, 16
    x1 = jax.random.normal(k1, (N, C, H, W), dtype=jnp.float32)
    t1 = jax.random.randint(k2, (N, H, W), 0, C, dtype=jnp.int32)
    alpha = [0.1, 0.2, 0.3, 0.4]
    out1 = jax.block_until_ready(
        focal_loss(x1, t1, gamma=2, alpha=alpha, size_average=True))
    ref1 = _focal_loss_ref(x1, t1, 2.0, jnp.array(alpha, jnp.float32), True)
    assert jnp.allclose(out1, ref1, rtol=1e-5, atol=1e-5), (out1, ref1)

    # Test 2: no alpha, gamma=0 (plain NLL), sum reduction.
    out2 = jax.block_until_ready(
        focal_loss(x1, t1, gamma=0, alpha=None, size_average=False))
    ref2 = _focal_loss_ref(x1, t1, 0.0, None, False)
    assert jnp.allclose(out2, ref2, rtol=1e-5, atol=1e-4), (out2, ref2)

    # Test 3: ragged spatial extent (L = 1600 -> padded to 1664) with a forced
    # small row tile so the multi-block grid + cold last-block mask path runs.
    H3, W3 = 40, 40
    x3 = jax.random.normal(k3, (N, C, H3, W3), dtype=jnp.float32)
    t3 = jax.random.randint(k4, (N, H3, W3), 0, C, dtype=jnp.int32)
    out3 = jax.block_until_ready(
        focal_loss(x3, t3, gamma=3, alpha=alpha, size_average=True,
                   max_rows_per_block=8))
    ref3 = _focal_loss_ref(x3, t3, 3.0, jnp.array(alpha, jnp.float32), True)
    assert jnp.allclose(out3, ref3, rtol=1e-5, atol=1e-5), (out3, ref3)

    # Test 4: already-flat (M, C) input (M = 40 -> padded to 128).
    M = 40
    x4 = jax.random.normal(k5, (M, C), dtype=jnp.float32)
    t4 = jax.random.randint(k6, (M,), 0, C, dtype=jnp.int32)
    out4 = jax.block_until_ready(
        focal_loss(x4, t4, gamma=2, alpha=None, size_average=True))
    ref4 = _focal_loss_ref(x4, t4, 2.0, None, True)
    assert jnp.allclose(out4, ref4, rtol=1e-5, atol=1e-5), (out4, ref4)

    print("KERNEL_OK")
</pallas_src>

<mosaic_0001>
module attributes {stable_mosaic.version = 11 : i64} {
  func.func @_focal_tile_kernel(%arg0: i32, %arg1: i32, %arg2: memref<1x4x2x128xf32, #tpu.memory_space<vmem>>, %arg3: memref<1x2x128xi32, #tpu.memory_space<vmem>>, %arg4: memref<1x1x1x1xf32, #tpu.memory_space<vmem>>) attributes {dimension_semantics = [#tpu.dimension_semantics<parallel>, #tpu.dimension_semantics<parallel>], iteration_bounds = array<i64: 2, 1>, scalar_prefetch = 0 : i64, scratch_operands = 0 : i64, tpu.core_type = #tpu.core_type<tc>, window_params = [{transform_indices = @transform_0, window_bounds = array<i64: 1, 4, 2, 128>}, {transform_indices = @transform_1, window_bounds = array<i64: 1, 2, 128>}, {transform_indices = @transform_2, window_bounds = array<i64: 1, 1, 1, 1>}]} {
    %c0 = arith.constant 0 : index
    %c0_0 = arith.constant 0 : index
    %c0_1 = arith.constant 0 : index
    %0 = vector.load %arg3[%c0, %c0_0, %c0_1] : memref<1x2x128xi32, #tpu.memory_space<vmem>>, vector<1x2x128xi32>
    %1 = vector.shape_cast %0 : vector<1x2x128xi32> to vector<2x128xi32>
    %c0_2 = arith.constant 0 : index
    %c0_3 = arith.constant 0 : index
    %c0_4 = arith.constant 0 : index
    %c0_5 = arith.constant 0 : index
    %2 = vector.load %arg2[%c0_2, %c0_3, %c0_4, %c0_5] : memref<1x4x2x128xf32, #tpu.memory_space<vmem>>, vector<1x1x2x128xf32>
    %3 = vector.shape_cast %2 : vector<1x1x2x128xf32> to vector<2x128xf32>
    %c0_6 = arith.constant 0 : index
    %c1 = arith.constant 1 : index
    %c0_7 = arith.constant 0 : index
    %c0_8 = arith.constant 0 : index
    %4 = vector.load %arg2[%c0_6, %c1, %c0_7, %c0_8] : memref<1x4x2x128xf32, #tpu.memory_space<vmem>>, vector<1x1x2x128xf32>
    %5 = vector.shape_cast %4 : vector<1x1x2x128xf32> to vector<2x128xf32>
    %6 = arith.maximumf %3, %5 : vector<2x128xf32>
    %c0_9 = arith.constant 0 : index
    %c2 = arith.constant 2 : index
    %c0_10 = arith.constant 0 : index
    %c0_11 = arith.constant 0 : index
    %7 = vector.load %arg2[%c0_9, %c2, %c0_10, %c0_11] : memref<1x4x2x128xf32, #tpu.memory_space<vmem>>, vector<1x1x2x128xf32>
    %8 = vector.shape_cast %7 : vector<1x1x2x128xf32> to vector<2x128xf32>
    %9 = arith.maximumf %6, %8 : vector<2x128xf32>
    %c0_12 = arith.constant 0 : index
    %c3 = arith.constant 3 : index
    %c0_13 = arith.constant 0 : index
    %c0_14 = arith.constant 0 : index
    %10 = vector.load %arg2[%c0_12, %c3, %c0_13, %c0_14] : memref<1x4x2x128xf32, #tpu.memory_space<vmem>>, vector<1x1x2x128xf32>
    %11 = vector.shape_cast %10 : vector<1x1x2x128xf32> to vector<2x128xf32>
    %12 = arith.maximumf %9, %11 : vector<2x128xf32>
    %cst = arith.constant 0.000000e+00 : f32
    %13 = vector.broadcast %cst : f32 to vector<2x128xf32>
    %cst_15 = arith.constant 0.000000e+00 : f32
    %14 = vector.broadcast %cst_15 : f32 to vector<2x128xf32>
    %cst_16 = arith.constant 0.000000e+00 : f32
    %15 = vector.broadcast %cst_16 : f32 to vector<2x128xf32>
    %c0_17 = arith.constant 0 : index
    %c0_18 = arith.constant 0 : index
    %c0_19 = arith.constant 0 : index
    %c0_20 = arith.constant 0 : index
    %16 = vector.load %arg2[%c0_17, %c0_18, %c0_19, %c0_20] : memref<1x4x2x128xf32, #tpu.memory_space<vmem>>, vector<1x1x2x128xf32>
    %17 = vector.shape_cast %16 : vector<1x1x2x128xf32> to vector<2x128xf32>
    %18 = arith.subf %17, %12 : vector<2x128xf32>
    %19 = math.exp %18 : vector<2x128xf32>
    %20 = arith.addf %13, %19 : vector<2x128xf32>
    %c0_i32 = arith.constant 0 : i32
    %21 = vector.broadcast %c0_i32 : i32 to vector<2x128xi32>
    %22 = arith.cmpi eq, %1, %21 : vector<2x128xi32>
    %23 = arith.select %22, %18, %14 : vector<2x128xi1>, vector<2x128xf32>
    %cst_21 = arith.constant 1.000000e-01 : f32
    %24 = vector.broadcast %cst_21 : f32 to vector<2x128xf32>
    %25 = arith.select %22, %24, %15 : vector<2x128xi1>, vector<2x128xf32>
    %c0_22 = arith.constant 0 : index
    %c1_23 = arith.constant 1 : index
    %c0_24 = arith.constant 0 : index
    %c0_25 = arith.constant 0 : index
    %26 = vector.load %arg2[%c0_22, %c1_23, %c0_24, %c0_25] : memref<1x4x2x128xf32, #tpu.memory_space<vmem>>, vector<1x1x2x128xf32>
    %27 = vector.shape_cast %26 : vector<1x1x2x128xf32> to vector<2x128xf32>
    %28 = arith.subf %27, %12 : vector<2x128xf32>
    %29 = math.exp %28 : vector<2x128xf32>
    %30 = arith.addf %20, %29 : vector<2x128xf32>
    %c1_i32 = arith.constant 1 : i32
    %31 = vector.broadcast %c1_i32 : i32 to vector<2x128xi32>
    %32 = arith.cmpi eq, %1, %31 : vector<2x128xi32>
    %33 = arith.select %32, %28, %23 : vector<2x128xi1>, vector<2x128xf32>
    %cst_26 = arith.constant 2.000000e-01 : f32
    %34 = vector.broadcast %cst_26 : f32 to vector<2x128xf32>
    %35 = arith.select %32, %34, %25 : vector<2x128xi1>, vector<2x128xf32>
    %c0_27 = arith.constant 0 : index
    %c2_28 = arith.constant 2 : index
    %c0_29 = arith.constant 0 : index
    %c0_30 = arith.constant 0 : index
    %36 = vector.load %arg2[%c0_27, %c2_28, %c0_29, %c0_30] : memref<1x4x2x128xf32, #tpu.memory_space<vmem>>, vector<1x1x2x128xf32>
    %37 = vector.shape_cast %36 : vector<1x1x2x128xf32> to vector<2x128xf32>
    %38 = arith.subf %37, %12 : vector<2x128xf32>
    %39 = math.exp %38 : vector<2x128xf32>
    %40 = arith.addf %30, %39 : vector<2x128xf32>
    %c2_i32 = arith.constant 2 : i32
    %41 = vector.broadcast %c2_i32 : i32 to vector<2x128xi32>
    %42 = arith.cmpi eq, %1, %41 : vector<2x128xi32>
    %43 = arith.select %42, %38, %33 : vector<2x128xi1>, vector<2x128xf32>
    %cst_31 = arith.constant 3.000000e-01 : f32
    %44 = vector.broadcast %cst_31 : f32 to vector<2x128xf32>
    %45 = arith.select %42, %44, %35 : vector<2x128xi1>, vector<2x128xf32>
    %c0_32 = arith.constant 0 : index
    %c3_33 = arith.constant 3 : index
    %c0_34 = arith.constant 0 : index
    %c0_35 = arith.constant 0 : index
    %46 = vector.load %arg2[%c0_32, %c3_33, %c0_34, %c0_35] : memref<1x4x2x128xf32, #tpu.memory_space<vmem>>, vector<1x1x2x128xf32>
    %47 = vector.shape_cast %46 : vector<1x1x2x128xf32> to vector<2x128xf32>
    %48 = arith.subf %47, %12 : vector<2x128xf32>
    %49 = math.exp %48 : vector<2x128xf32>
    %50 = arith.addf %40, %49 : vector<2x128xf32>
    %c3_i32 = arith.constant 3 : i32
    %51 = vector.broadcast %c3_i32 : i32 to vector<2x128xi32>
    %52 = arith.cmpi eq, %1, %51 : vector<2x128xi32>
    %53 = arith.select %52, %48, %43 : vector<2x128xi1>, vector<2x128xf32>
    %cst_36 = arith.constant 4.000000e-01 : f32
    %54 = vector.broadcast %cst_36 : f32 to vector<2x128xf32>
    %55 = arith.select %52, %54, %45 : vector<2x128xi1>, vector<2x128xf32>
    %56 = math.log %50 : vector<2x128xf32>
    %57 = arith.subf %53, %56 : vector<2x128xf32>
    %58 = math.exp %57 : vector<2x128xf32>
    %59 = arith.mulf %57, %55 : vector<2x128xf32>
    %cst_37 = arith.constant 1.000000e+00 : f32
    %60 = vector.broadcast %cst_37 : f32 to vector<2x128xf32>
    %61 = arith.subf %60, %58 : vector<2x128xf32>
    %62 = arith.mulf %61, %61 : vector<2x128xf32>
    %63 = arith.mulf %62, %59 : vector<2x128xf32>
    %cst_38 = arith.constant 0.000000e+00 : f32
    %64 = vector.broadcast %cst_38 : f32 to vector<2x128xf32>
    %65 = arith.subf %64, %63 : vector<2x128xf32>
    %cst_39 = arith.constant dense<0.000000e+00> : vector<2xf32>
    %66 = vector.multi_reduction <add>, %65, %cst_39 [1] : vector<2x128xf32> to vector<2xf32>
    %67 = vector.shape_cast %66 : vector<2xf32> to vector<2x1xf32>
    %cst_40 = arith.constant dense<0.000000e+00> : vector<1xf32>
    %68 = vector.multi_reduction <add>, %67, %cst_40 [0] : vector<2x1xf32> to vector<1xf32>
    %69 = vector.shape_cast %68 : vector<1xf32> to vector<1x1xf32>
    %70 = vector.shape_cast %69 : vector<1x1xf32> to vector<1x1x1x1xf32>
    %c0_41 = arith.constant 0 : index
    %c0_42 = arith.constant 0 : index
    %c0_43 = arith.constant 0 : index
    %c0_44 = arith.constant 0 : index
    %71 = vector.load %arg4[%c0_41, %c0_42, %c0_43, %c0_44] : memref<1x1x1x1xf32, #tpu.memory_space<vmem>>, vector<1x1x1x1xf32>
    tpu.vector_store %arg4[%c0_41, %c0_42, %c0_43, %c0_44], %70 {strides = array<i32>} : memref<1x1x1x1xf32, #tpu.memory_space<vmem>>, vector<1x1x1x1xf32>,
    return
  }
  func.func @transform_0(%arg0: i32, %arg1: i32) -> (i32, i32, i32, i32) {
    %c0_i32 = arith.constant 0 : i32
    %c0_i32_0 = arith.constant 0 : i32
    %c0_i32_1 = arith.constant 0 : i32
    return %arg0, %c0_i32, %arg1, %c0_i32_0 : i32, i32, i32, i32
  }
  func.func @transform_1(%arg0: i32, %arg1: i32) -> (i32, i32, i32) {
    %c0_i32 = arith.constant 0 : i32
    %c0_i32_0 = arith.constant 0 : i32
    return %arg0, %arg1, %c0_i32 : i32, i32, i32
  }
  func.func @transform_2(%arg0: i32, %arg1: i32) -> (i32, i32, i32, i32) {
    %c0_i32 = arith.constant 0 : i32
    %c0_i32_0 = arith.constant 0 : i32
    %c0_i32_1 = arith.constant 0 : i32
    return %arg0, %arg1, %c0_i32, %c0_i32_0 : i32, i32, i32, i32
  }
}

</mosaic_0001>

<llo_original>
// kernel: tpu_custom_call.1
$region0: #{tpu_custom_call.1}
  #allocation0 [shape = 'u32[]', space=smem, size = 0x4, offset = 0x4, fixed_abs, tag = 'smem constant byte address 0x4 - core index']
  #allocation1 [shape = 'u32[144,128]{1,0:T(1,128)}', space=vmem, size = 0x12000, scoped, tag = 'internal scratch']
  %s0 = inlined_call_operand.hbm [shape: f32[2,4,2,128], index: 0, kind: input, shape index: {}]
  %s1 = inlined_call_operand.hbm [shape: s32[2,2,128], index: 1, kind: input, shape index: {}]
  %s2 = inlined_call_operand.vmem [shape: f32[2,1,1,1], index: 2, kind: output, shape index: {}]
  %s3 = sld [smem:[#allocation0]]
  $region49: #{tpu_custom_call.1} parent=0
    _
  %s5 = ssub.s32 1, %s3
  %s6 = scalar_select 0, %s5, %s3
  $region1: #{tpu_custom_call.1} parent=0
    #allocation2 [shape = 'u8[8192]{0}', space=vmem, size = 0x2000, scoped, tag = 'input window, operand 0']
    #allocation3 [shape = 's32[2]{0}', space=sflag, size = 0x8, scoped, tag = 'scoped memory for tpu_custom_call.1']
    #allocation4 [shape = 'u8[2048]{0}', space=vmem, size = 0x800, scoped, tag = 'input window, operand 1']
    #allocation5 [shape = 's32[2]{0}', space=sflag, size = 0x8, scoped, tag = 'scoped memory for tpu_custom_call.1']
    %7 = vsyncpa [#allocation3], 0
    %s8 = scalar_lea.sflag [#allocation3], 1
    %9 = vsyncpa %s8, 0
    %10 = vsyncpa [#allocation5], 0
    %s11 = scalar_lea.sflag [#allocation5], 1
    %12 = vsyncpa %s11, 0
    loop: start=0, step=1, limit=4
    $region2: #{tpu_custom_call.1} parent=1 // loop_pre_header
      _
    $region3: #{tpu_custom_call.1} parent=1 // loop_header
      %s14 = sphi 0, %s18
      %p15 = scmp.ge.s32.totalorder %s14, 4
      %s21 = sphi 0, %s33
      %s22 = sphi 0, %s29
      %s23 = sphi 0, %s21
      %s24 = sphi 0, %s22
      %s25 = sphi 0, %s23
      %s26 = sphi 0, %s24
      %s38 = sphi 0, %s40
      %s41 = sphi 0, %s38
      %s42 = sphi 0, %s41
      %s58 = sphi 0, %s42
      %s66 = sphi 0, %s68
      %s69 = sphi 0, %s66
      %s70 = sphi 0, %s69
      %s86 = sphi 0, %s70
      %s94 = sphi 0, %s96
      %s97 = sphi 0, %s94
      %s98 = sphi 0, %s97
      %s114 = sphi 0, %s98
    $region4: #{tpu_custom_call.1} parent=1 // loop_header_branch
      %17 = sbr.rel (%p15) target = $region8
    $region5: #{tpu_custom_call.1} parent=1 // loop_body
      %s19 = ssub.s32 %s14, 1
      %s20 = ssub.s32 %s14, 2
      %s27 = sadd.s32 1, %s22
      %p28 = scmp.ge.s32.totalorder %s27, 1
      %s29 = scalar_select %p28, 0, %s27
      %s30 = sadd.s32 1, %s21
      %s31 = scalar_select %p28, %s30, %s21
      %p32 = scmp.ge.s32.totalorder %s31, 2
      %s33 = scalar_select %p32, 0, %s31
      %s34 = ssub.s32 %s21, %s33
      %s35 = ssub.s32 %s22, %s29
      %s36 = sor.u32 %s34, %s35
      %p37 = scmp.eq.s32.totalorder %s36, 0
      %s39 = sadd.s32 %s38, 1
      %s40 = scalar_select %p37, %s38, %s39
      %p43 = pneg %p37
      %p44 = scmp.eq.s32.totalorder %s14, 1
      %p45 = por %p43, %p44
      %p46 = scmp.ne.s32.totalorder %s38, %s41
      %p47 = scmp.eq.s32.totalorder %s14, 0
      %p48 = por %p46, %p47
      %p49 = scmp.ne.s32.totalorder %s38, %s41
      %p50 = scmp.eq.s32.totalorder %s19, 1
      %p51 = por %p49, %p50
      %p52 = scmp.ne.s32.totalorder %s41, %s42
      %p53 = scmp.eq.s32.totalorder %s19, 0
      %p54 = por %p52, %p53
      %p55 = scmp.ne.s32.totalorder %s41, %s42
      %p56 = scmp.eq.s32.totalorder %s20, 1
      %p57 = por %p55, %p56
      %p59 = scmp.ne.s32.totalorder %s42, %s58
      %p60 = scmp.eq.s32.totalorder %s20, 0
      %p61 = por %p59, %p60
      %s62 = ssub.s32 %s21, %s33
      %s63 = ssub.s32 %s22, %s29
      %s64 = sor.u32 %s62, %s63
      %p65 = scmp.eq.s32.totalorder %s64, 0
      %s67 = sadd.s32 %s66, 1
      %s68 = scalar_select %p65, %s66, %s67
      %p71 = pneg %p65
      %p72 = scmp.eq.s32.totalorder %s14, 1
      %p73 = por %p71, %p72
      %p74 = scmp.ne.s32.totalorder %s66, %s69
      %p75 = scmp.eq.s32.totalorder %s14, 0
      %p76 = por %p74, %p75
      %p77 = scmp.ne.s32.totalorder %s66, %s69
      %p78 = scmp.eq.s32.totalorder %s19, 1
      %p79 = por %p77, %p78
      %p80 = scmp.ne.s32.totalorder %s69, %s70
      %p81 = scmp.eq.s32.totalorder %s19, 0
      %p82 = por %p80, %p81
      %p83 = scmp.ne.s32.totalorder %s69, %s70
      %p84 = scmp.eq.s32.totalorder %s20, 1
      %p85 = por %p83, %p84
      %p87 = scmp.ne.s32.totalorder %s70, %s86
      %p88 = scmp.eq.s32.totalorder %s20, 0
      %p89 = por %p87, %p88
      %s90 = ssub.s32 %s21, %s33
      %s91 = ssub.s32 %s22, %s29
      %s92 = sor.u32 %s90, %s91
      %p93 = scmp.eq.s32.totalorder %s92, 0
      %s95 = sadd.s32 %s94, 1
      %s96 = scalar_select %p93, %s94, %s95
      %p99 = pneg %p93
      %p100 = scmp.eq.s32.totalorder %s14, 1
      %p101 = por %p99, %p100
      %p102 = scmp.ne.s32.totalorder %s94, %s97
      %p103 = scmp.eq.s32.totalorder %s14, 0
      %p104 = por %p102, %p103
      %p105 = scmp.ne.s32.totalorder %s94, %s97
      %p106 = scmp.eq.s32.totalorder %s19, 1
      %p107 = por %p105, %p106
      %p108 = scmp.ne.s32.totalorder %s97, %s98
      %p109 = scmp.eq.s32.totalorder %s19, 0
      %p110 = por %p108, %p109
      %p111 = scmp.ne.s32.totalorder %s97, %s98
      %p112 = scmp.eq.s32.totalorder %s20, 1
      %p113 = por %p111, %p112
      %p115 = scmp.ne.s32.totalorder %s98, %s114
      %p116 = scmp.eq.s32.totalorder %s20, 0
      %p117 = por %p115, %p116
      %p118 = scmp.le.s32.totalorder 1, %s14
      %p119 = scmp.lt.s32.totalorder %s14, 3
      %p120 = pnand %p118, %p119
      %p121 = pneg %p120
      // Predicated region
      $region9: #{tpu_custom_call.1} parent=5 // pred_check
        _
      $region10: #{tpu_custom_call.1} parent=5 // pred_check_branch
        %123 = sbr.rel (%p120) target = $region12
      $region11: #{tpu_custom_call.1} parent=5 // pred_region
        %s124 = ssub.s32 %s14, 1
      $region12: #{tpu_custom_call.1} parent=5 // pred_fallthru
        _
      %p125 = scmp.lt.s32.totalorder %s14, 2
      // Predicated region
      $region13: #{tpu_custom_call.1} parent=5 // pred_check
        %p126 = pneg %p125
      $region14: #{tpu_custom_call.1} parent=5 // pred_check_branch
        %128 = sbr.rel (%p126) target = $region16
      $region15: #{tpu_custom_call.1} parent=5 // pred_region
        // Predicated region
        $region17: #{tpu_custom_call.1} parent=15 // pred_check
          %p129 = pneg %p48
        $region18: #{tpu_custom_call.1} parent=15 // pred_check_branch
          %131 = sbr.rel (%p129) target = $region20
        $region19: #{tpu_custom_call.1} parent=15 // pred_region
          %s132 = sand.u32 %s38, 1
          %s133 = scalar_lea.sflag [#allocation3], %s132
          %s134 = sand.u32 %s38, 1
          %s135 = smul.addr %s134, 8
          %s136 = scalar_lea.vmem [#allocation2], %s135
          %s138 = ssub.s32 128, 128
          %139 = vsyncadd %s133, %s138
          %s140 = smul.addr %s21, 4
          %s141 = sadd.s32 %s22, %s140
          %s142 = smul.addr %s141, 32
          %s143 = scalar_lea.hbm %s0, %s142
          %s144 = sshll.u32 %s136, 4
          %s145 = int_to_ptr.vmem [resolvable:$true] %s144
          %150 = dma.hbm_to_vmem [thread:$0]  %s143, 128, %s145, %s133, 32, 32, 2
        $region20: #{tpu_custom_call.1} parent=15 // pred_fallthru
          _
        // Predicated region
        $region21: #{tpu_custom_call.1} parent=15 // pred_check
          %p151 = pneg %p76
        $region22: #{tpu_custom_call.1} parent=15 // pred_check_branch
          %153 = sbr.rel (%p151) target = $region24
        $region23: #{tpu_custom_call.1} parent=15 // pred_region
          %s154 = sand.u32 %s66, 1
          %s155 = scalar_lea.sflag [#allocation5], %s154
          %s156 = sand.u32 %s66, 1
          %s157 = smul.addr %s156, 2
          %s158 = scalar_lea.vmem [#allocation4], %s157
          %s160 = ssub.s32 32, 32
          %161 = vsyncadd %s155, %s160
          %s162 = sadd.s32 %s22, %s21
          %s163 = smul.addr %s162, 32
          %s164 = scalar_lea.hbm %s1, %s163
          %s166 = sshll.u32 %s158, 4
          %s167 = int_to_ptr.vmem [resolvable:$true] %s166
          %169 = dma.hbm_to_vmem [thread:$0]  %s164, 32, %s167, %s155
        $region24: #{tpu_custom_call.1} parent=15 // pred_fallthru
          _
      $region16: #{tpu_custom_call.1} parent=5 // pred_fallthru
        _
      %p170 = scmp.le.s32.totalorder 1, %s14
      %p171 = scmp.lt.s32.totalorder %s14, 3
      %p172 = pnand %p170, %p171
      %p173 = pneg %p172
      // Predicated region
      $region25: #{tpu_custom_call.1} parent=5 // pred_check
        _
      $region26: #{tpu_custom_call.1} parent=5 // pred_check_branch
        %175 = sbr.rel (%p172) target = $region28
      $region27: #{tpu_custom_call.1} parent=5 // pred_region
        %s176 = ssub.s32 %s14, 1
        %s177 = sand.u32 %s41, 1
        %s178 = scalar_lea.sflag [#allocation3], %s177
        %s179 = sand.u32 %s41, 1
        %s180 = smul.addr %s179, 8
        %s181 = scalar_lea.vmem [#allocation2], %s180
        // Predicated region
        $region29: #{tpu_custom_call.1} parent=27 // pred_check
          %p182 = pneg %p54
        $region30: #{tpu_custom_call.1} parent=27 // pred_check_branch
          %184 = sbr.rel (%p182) target = $region32
        $region31: #{tpu_custom_call.1} parent=27 // pred_region
          %185 = dma.done %s178, 128
        $region32: #{tpu_custom_call.1} parent=27 // pred_fallthru
          _
        %s186 = sand.u32 %s69, 1
        %s187 = scalar_lea.sflag [#allocation5], %s186
        %s188 = sand.u32 %s69, 1
        %s189 = smul.addr %s188, 2
        %s190 = scalar_lea.vmem [#allocation4], %s189
        // Predicated region
        $region33: #{tpu_custom_call.1} parent=27 // pred_check
          %p191 = pneg %p82
        $region34: #{tpu_custom_call.1} parent=27 // pred_check_branch
          %193 = sbr.rel (%p191) target = $region36
        $region35: #{tpu_custom_call.1} parent=27 // pred_region
          %194 = dma.done %s187, 32
        $region36: #{tpu_custom_call.1} parent=27 // pred_fallthru
          _
        %s195 = sand.u32 %s41, 1
        %s196 = scalar_lea.sflag [#allocation3], %s195
        %s197 = sand.u32 %s41, 1
        %s198 = smul.addr %s197, 8
        %s199 = scalar_lea.vmem [#allocation2], %s198
        %p200 = pneg %p54
        %p201 = pneg %p51
        %s202 = sand.u32 %s69, 1
        %s203 = scalar_lea.sflag [#allocation5], %s202
        %s204 = sand.u32 %s69, 1
        %s205 = smul.addr %s204, 2
        %s206 = scalar_lea.vmem [#allocation4], %s205
        %p207 = pneg %p82
        %p208 = pneg %p79
        %p209 = pneg %p110
        %p210 = pneg %p107
        %p211 = scmp.lt.s32.totalorder %s23, 1
        %s212 = scalar_select %p211, %s23, 1
        %p213 = scmp.lt.s32.totalorder %s24, 0
        %s214 = scalar_select %p213, %s24, 0
        %s215 = sadd.s32 %s214, %s212
        %s216 = scalar_lea.vmem %s2, %s215
        %p217 = scmp.lt.s32.totalorder %s23, 1
        %s218 = scalar_select %p217, %s23, 1
        %p219 = scmp.lt.s32.totalorder %s24, 0
        %s220 = scalar_select %p219, %s24, 0
        %s221 = sadd.s32 %s220, %s218
        %s222 = scalar_lea.vmem %s2, %s221
        %v223 = vld [vmem:[%s190] sm:$0x3]
        %v224 = vld [vmem:[%s181] sm:$0x3]
        %s225 = scalar_lea.vmem %s181, 2 [#allocation2]
        %v226 = vld [vmem:[%s225] sm:$0x3]
        %v227 = vmax.f32 %v224, %v226
        %s228 = scalar_lea.vmem %s181, 4 [#allocation2]
        %v229 = vld [vmem:[%s228] sm:$0x3]
        %v230 = vmax.f32 %v227, %v229
        %s231 = scalar_lea.vmem %s181, 6 [#allocation2]
        %v232 = vld [vmem:[%s231] sm:$0x3]
        %v233 = vmax.f32 %v230, %v232
        %v234 = vsub.f32 %v224, %v233
        %v235 = vmul.f32 %v234, 1.442695
        %v236 = vpow.pop %v235
        %v237 = vadd.f32 %v236, 0.0
        %vm238 = vcmp.eq.s32.totalorder %v223, 0
        %v239 = vsel %vm238, %v234, 0.0
        %v240 = vsel %vm238, 0.1, 0.0
        %v241 = vsub.f32 %v226, %v233
        %v242 = vmul.f32 %v241, 1.442695
        %v243 = vpow.pop %v242
        %v244 = vadd.f32 %v237, %v243
        %vm245 = vcmp.eq.s32.totalorder %v223, 1
        %v246 = vsel %vm245, %v241, %v239
        %v247 = vsel %vm245, 0.2, %v240
        %v248 = vsub.f32 %v229, %v233
        %v249 = vmul.f32 %v248, 1.442695
        %v250 = vpow.pop %v249
        %v251 = vadd.f32 %v244, %v250
        %vm252 = vcmp.eq.s32.totalorder %v223, 2
        %v253 = vsel %vm252, %v248, %v246
        %v254 = vsel %vm252, 0.3, %v247
        %v255 = vsub.f32 %v232, %v233
        %v256 = vmul.f32 %v255, 1.442695
        %v257 = vpow.pop %v256
        %v258 = vadd.f32 %v251, %v257
        %vm259 = vcmp.eq.s32.totalorder %v223, 3
        %v260 = vsel %vm259, %v255, %v253
        %v261 = vsel %vm259, 0.4, %v254
        %v262 = vlog2.pop %v258
        %v263 = vmul.f32 %v262, 0.6931472
        %v264 = vsub.f32 %v260, %v263
        %v265 = vmul.f32 %v264, 1.442695
        %v266 = vpow.pop %v265
        %v267 = vmul.f32 %v264, %v261
        %v268 = vsub.f32 1.0, %v266
        %v269 = vmul.f32 %v268, %v268
        %v270 = vmul.f32 %v269, %v267
        %v271 = vsub.f32 0.0, %v270
        %vm272 = vcmask 1041408
        %v273 = vsel %vm272, %v271, 0.0
        %274 = vadd.xlane.f32.xlu0 %v273
        %v275 = vpop.xlane.xlu0 %274
        %v276 = vsel %vm272, %v275, 0.0
        %v277 = vrot.slane %v276, 4
        %v278 = vadd.f32 %v276, %v277
        %v279 = vrot.slane %v278, 2
        %v280 = vadd.f32 %v278, %v279
        %v281 = vrot.slane %v280, 1
        %v282 = vadd.f32 %v280, %v281
        %vm283 = vcmask 0
        %284 = vst.msk [vmem:[%s222] sm:$0x1] %vm283, %v282
        %p285 = scmp.lt.s32.totalorder %s23, 1
        %s286 = scalar_select %p285, %s23, 1
        %p287 = scmp.lt.s32.totalorder %s24, 0
        %s288 = scalar_select %p287, %s24, 0
        %s289 = sadd.s32 %s288, %s286
        %s290 = scalar_lea.vmem %s2, %s289
        // Predicated region
        $region37: #{tpu_custom_call.1} parent=27 // pred_check
          %p291 = pneg %p107
        $region38: #{tpu_custom_call.1} parent=27 // pred_check_branch
          %293 = sbr.rel (%p291) target = $region40
        $region39: #{tpu_custom_call.1} parent=27 // pred_region
          _
        $region40: #{tpu_custom_call.1} parent=27 // pred_fallthru
          _
      $region28: #{tpu_custom_call.1} parent=5 // pred_fallthru
        _
      %p294 = scmp.le.s32.totalorder 2, %s14
      // Predicated region
      $region41: #{tpu_custom_call.1} parent=5 // pred_check
        %p295 = pneg %p294
      $region42: #{tpu_custom_call.1} parent=5 // pred_check_branch
        %297 = sbr.rel (%p295) target = $region44
      $region43: #{tpu_custom_call.1} parent=5 // pred_region
        %s298 = ssub.s32 %s14, 2
        // Predicated region
        $region45: #{tpu_custom_call.1} parent=43 // pred_check
          %p299 = pneg %p113
        $region46: #{tpu_custom_call.1} parent=43 // pred_check_branch
          %301 = sbr.rel (%p299) target = $region48
        $region47: #{tpu_custom_call.1} parent=43 // pred_region
          %p302 = scmp.lt.s32.totalorder %s25, 1
          %s303 = scalar_select %p302, %s25, 1
          %p304 = scmp.lt.s32.totalorder %s26, 0
          %s305 = scalar_select %p304, %s26, 0
          %s306 = sadd.s32 %s305, %s303
          %s307 = scalar_lea.vmem %s2, %s306
        $region48: #{tpu_custom_call.1} parent=43 // pred_fallthru
          _
      $region44: #{tpu_custom_call.1} parent=5 // pred_fallthru
        _
    $region6: #{tpu_custom_call.1} parent=1 // loop_footer
      %s18 = sadd.s32 1, %s14
    $region7: #{tpu_custom_call.1} parent=1 // loop_footer_branch
      %13 = sbr.rel target = $region3
    $region8: #{tpu_custom_call.1} parent=1 // loop_exit
      _
    %308 = vsyncpa [#allocation3], 1
    %s309 = scalar_lea.sflag [#allocation3], 1
    %310 = vsyncpa %s309, 1
    %311 = vsyncpa [#allocation5], 1
    %s312 = scalar_lea.sflag [#allocation5], 1
    %313 = vsyncpa %s312, 1

</llo_original>
